<compile_context>
chip_gen: v7x
topology: tpu7x:2x2x1
jax: 0.10.0
libtpu: 0.0.40
codegen_flags: <defaults>
</compile_context>

<pallas_src>
import functools

import jax
import jax.numpy as jnp
from jax import lax
from jax.experimental import pallas as pl
from jax.experimental.pallas import tpu as pltpu

_LANES = 128


def _classifier_kernel(x_ref, w_ref, b_ref, o_ref, acc_ref, *, k_total, tile_k):
    # x_ref  : (tile_n, tile_k)  activations (f32 or bf16), flattened C*H*W axis
    # w_ref  : (1, tile_k)  f32  Linear weight pre-scaled by 1/(H*W), repeated over H*W
    # b_ref  : (1, 1)       f32  Linear bias
    # o_ref  : (tile_n, 1)       output (matches activation dtype)
    # acc_ref: (tile_n, 128) f32 lane accumulator, persists across the K grid axis
    k = pl.program_id(1)
    nk = pl.num_programs(1)

    tile_n = acc_ref.shape[0]
    m = tile_k // _LANES                  # full 128-lane chunks per block
    r = tile_k - m * _LANES               # static remainder (only when tile_k == k_total)
    has_tail = (k_total % tile_k) != 0    # last K block is partial -> mask it (and only it)

    @pl.when(k == 0)
    def _init():
        acc_ref[...] = jnp.zeros_like(acc_ref)

    def _accumulate(masked):
        base = k * tile_k

        if m > 0:
            def chunk_body(i, carry):
                off = pl.multiple_of(i * _LANES, _LANES)
                xs = x_ref[:, pl.ds(off, _LANES)].astype(jnp.float32)
                ws = w_ref[:, pl.ds(off, _LANES)].astype(jnp.float32)
                p = xs * ws
                if masked:
                    lane = lax.broadcasted_iota(jnp.int32, (1, _LANES), 1)
                    p = jnp.where(lane + off + base < k_total, p, 0.0)
                return carry + p

            carry0 = jnp.zeros((tile_n, _LANES), jnp.float32)
            partial = lax.fori_loop(0, m, chunk_body, carry0, unroll=min(8, m))
            acc_ref[...] += partial

        if r > 0:
            # Only reachable when the whole K axis fits in one block (nk == 1),
            # so this runs once per batch tile; a small cross-lane reduce is fine.
            xs = x_ref[:, pl.ds(m * _LANES, r)].astype(jnp.float32)
            ws = w_ref[:, pl.ds(m * _LANES, r)].astype(jnp.float32)
            acc_ref[:, 0:1] += jnp.sum(xs * ws, axis=-1, keepdims=True)

    if has_tail:
        @pl.when(k < nk - 1)
        def _full_step():
            _accumulate(masked=False)

        @pl.when(k == nk - 1)
        def _tail_step():
            _accumulate(masked=True)
    else:
        _accumulate(masked=False)

    @pl.when(k == nk - 1)
    def _finalize():
        logits = jnp.sum(acc_ref[...], axis=-1, keepdims=True) + b_ref[...]
        # Exact sigmoid: runs once per batch tile on a (tile_n, 1) vector, so the
        # EUP / divide cost is invisible -- no approximate reciprocal needed.
        probs = 1.0 / (1.0 + jnp.exp(-logits))
        o_ref[...] = probs.astype(o_ref.dtype)


def _round_up(x, m):
    return (x + m - 1) // m * m


def _pick_tile_n(n):
    """Batch tile: multiple of 8, and >= 2 batch tiles whenever n > 8 so the
    'parallel' batch axis can use both TensorCores on v7x."""
    if n <= 8:
        return n
    return min(64, _round_up(pl.cdiv(n, 2), 8))


def _pick_tile_k(k_total, tile_n, itemsize, budget_bytes):
    """Reduction tile: enforce the per-buffer VMEM byte budget, keep it a multiple
    of 128 lanes, and prefer a value that divides K exactly (removes the tail mask)."""
    if tile_n * k_total * itemsize <= budget_bytes:
        return k_total                                   # whole K axis in one block
    cap = (budget_bytes // (tile_n * itemsize)) // _LANES * _LANES
    cap = max(cap, _LANES)
    cap = min(cap, max(k_total // _LANES, 1) * _LANES)
    t = cap
    while t >= max(cap // 2, _LANES):
        if k_total % t == 0:
            return t
        t -= _LANES
    return cap                                           # masked-tail fallback


def _vmem_limit_bytes():
    # Generation-aware VMEM ceiling: ~half of physical VMEM, never below the
    # 32 MiB scoped default, never above 96 MiB (v5e/v6e: 128 MiB, v7x: 64 MiB).
    try:
        cap = int(pltpu.get_tpu_info().vmem_capacity_bytes)
    except Exception:
        cap = 64 * 1024 * 1024
    return int(min(max(cap // 2, 32 * 1024 * 1024), 96 * 1024 * 1024))


@functools.partial(jax.jit, static_argnames=("tile_n", "tile_k", "vmem_budget_bytes"))
def classifier_forward(x_nchw, weight, bias, *, tile_n=None, tile_k=None,
                       vmem_budget_bytes=8 * 1024 * 1024):
    """Forward of `Classifier`: sigmoid(Linear(mean_{H,W}(x))).squeeze().

    x_nchw: (N, C, H, W) activations, NCHW like PyTorch.  bf16 activations are the
            recommended streaming dtype (HBM-bound kernel; f32 cast is per-chunk
            inside the kernel, accumulation stays f32).
    weight: (1, C)  PyTorch nn.Linear weight layout.   bias: (1,).
    Returns torch .squeeze() semantics: shape (N,) (scalar if N == 1).
    """
    N, C, H, W = x_nchw.shape
    HW = H * W
    K = C * HW
    x_flat = x_nchw.reshape(N, K)                        # free reshape (contiguous)
    itemsize = jnp.dtype(x_flat.dtype).itemsize

    tn = _pick_tile_n(N) if tile_n is None else int(tile_n)
    tk = _pick_tile_k(K, tn, itemsize, vmem_budget_bytes) if tile_k is None else min(int(tile_k), K)
    if tk < K and tk % _LANES != 0:
        raise ValueError(f"tile_k={tk} must be a multiple of {_LANES} when it does not cover K={K}")

    # Fold the 1/(H*W) mean into the Linear weight and repeat it over the spatial
    # positions so the kernel is a single flat lane-dense weighted dot per row.
    w_rep = jnp.repeat(weight.reshape(-1).astype(jnp.float32) / float(HW), HW).reshape(1, K)
    b = bias.astype(jnp.float32).reshape(1, 1)

    grid = (pl.cdiv(N, tn), pl.cdiv(K, tk))
    kernel = functools.partial(_classifier_kernel, k_total=K, tile_k=tk)

    out = pl.pallas_call(
        kernel,
        out_shape=jax.ShapeDtypeStruct((N, 1), x_flat.dtype),
        grid=grid,
        in_specs=[
            pl.BlockSpec((tn, tk), lambda i, k: (i, k)),
            pl.BlockSpec((1, tk), lambda i, k: (0, k)),
            pl.BlockSpec((1, 1), lambda i, k: (0, 0)),
        ],
        out_specs=pl.BlockSpec((tn, 1), lambda i, k: (i, 0)),
        scratch_shapes=[pltpu.VMEM((tn, _LANES), jnp.float32)],
        compiler_params=pltpu.CompilerParams(
            dimension_semantics=("parallel", "arbitrary"),
            vmem_limit_bytes=_vmem_limit_bytes(),
        ),
        cost_estimate=pl.CostEstimate(
            flops=2 * N * K + 4 * N,
            transcendentals=N,
            bytes_accessed=N * K * itemsize + K * 4 + N * itemsize + 4,
        ),
    )(x_flat, w_rep, b)

    return jnp.squeeze(out)   # torch .squeeze(): (N,) (scalar if N == 1)


if __name__ == "__main__":
    key = jax.random.PRNGKey(0)
    k_x, k_w, k_b, k_x2 = jax.random.split(key, 4)

    # Toy shapes consistent with the module (input_dim = C = 4).
    N, C, H, W = 2, 4, 16, 16
    x = jax.random.normal(k_x, (N, C, H, W), dtype=jnp.float32)

    # PyTorch nn.Linear parameter layout: weight (1, C), bias (1,)
    bound = 1.0 / (C ** 0.5)
    weight = jax.random.uniform(k_w, (1, C), minval=-bound, maxval=bound, dtype=jnp.float32)
    bias = jax.random.uniform(k_b, (1,), minval=-bound, maxval=bound, dtype=jnp.float32)

    def reference(xx):
        pooled = jnp.mean(xx.astype(jnp.float32), axis=(2, 3))          # (N, C)
        return jax.nn.sigmoid(pooled @ weight.T + bias).reshape(-1)

    ref = reference(x)

    # 1) Default tiling: K = 1024 fits one block.
    out_auto = jax.block_until_ready(classifier_forward(x, weight, bias))
    assert out_auto.shape == (N,)
    assert jnp.allclose(out_auto, ref, atol=1e-4, rtol=1e-4), (out_auto, ref)

    # 2) Forced multi-step reduction (tile_k=256 divides K): exercises the f32
    #    accumulator across the "arbitrary" grid axis, no tail mask emitted.
    out_tiled = jax.block_until_ready(classifier_forward(x, weight, bias, tile_k=256))
    assert jnp.allclose(out_tiled, ref, atol=1e-4, rtol=1e-4), (out_tiled, ref)

    # 3) bf16 activations stream half the HBM bytes; accumulation stays f32.
    out_bf16 = jax.block_until_ready(
        classifier_forward(x.astype(jnp.bfloat16), weight, bias, tile_k=256))
    assert jnp.allclose(out_bf16.astype(jnp.float32), ref, atol=2e-2, rtol=2e-2), (out_bf16, ref)

    # 4) K not a multiple of 128 (7x7 head): default path hits the single-block
    #    remainder; forced tile_k=128 exercises the pl.when-guarded masked tail.
    H2 = W2 = 7
    x2 = jax.random.normal(k_x2, (N, C, H2, W2), dtype=jnp.float32)
    ref2 = reference(x2)
    out2_auto = jax.block_until_ready(classifier_forward(x2, weight, bias))
    out2_tail = jax.block_until_ready(classifier_forward(x2, weight, bias, tile_k=128))
    assert jnp.allclose(out2_auto, ref2, atol=1e-4, rtol=1e-4), (out2_auto, ref2)
    assert jnp.allclose(out2_tail, ref2, atol=1e-4, rtol=1e-4), (out2_tail, ref2)

    print("KERNEL_OK")
</pallas_src>

<mosaic_0001>
module attributes {stable_mosaic.version = 11 : i64} {
  func.func @_classifier_kernel(%arg0: i32, %arg1: i32, %arg2: memref<2x1024xf32, #tpu.memory_space<vmem>>, %arg3: memref<1x1024xf32, #tpu.memory_space<vmem>>, %arg4: memref<1x1xf32, #tpu.memory_space<vmem>>, %arg5: memref<2x1xf32, #tpu.memory_space<vmem>>, %arg6: memref<2x128xf32, #tpu.memory_space<vmem>>) attributes {dimension_semantics = [#tpu.dimension_semantics<parallel>, #tpu.dimension_semantics<arbitrary>], iteration_bounds = array<i64: 1, 1>, scalar_prefetch = 0 : i64, scratch_operands = 1 : i64, tpu.core_type = #tpu.core_type<tc>, window_params = [{transform_indices = @transform_0, window_bounds = array<i64: 2, 1024>}, {transform_indices = @transform_1, window_bounds = array<i64: 1, 1024>}, {pipeline_mode = #tpu.pipeline_mode<synchronous>, transform_indices = @transform_2, window_bounds = array<i64: 1, 1>}, {transform_indices = @transform_3, window_bounds = array<i64: 2, 1>}]} {
    %c0_i32 = arith.constant 0 : i32
    %0 = arith.cmpi eq, %arg1, %c0_i32 : i32
    %1 = arith.extui %0 : i1 to i32
    %c0_i32_0 = arith.constant 0 : i32
    %2 = arith.cmpi ne, %1, %c0_i32_0 : i32
    scf.if %2 {
      %cst_30 = arith.constant 0.000000e+00 : f32
      %82 = vector.broadcast %cst_30 : f32 to vector<2x128xf32>
      %c0_31 = arith.constant 0 : index
      %c0_32 = arith.constant 0 : index
      %83 = vector.load %arg6[%c0_31, %c0_32] : memref<2x128xf32, #tpu.memory_space<vmem>>, vector<2x128xf32>
      tpu.vector_store %arg6[%c0_31, %c0_32], %82 {strides = array<i32>} : memref<2x128xf32, #tpu.memory_space<vmem>>, vector<2x128xf32>,
    } else {
    }
    %cst = arith.constant 0.000000e+00 : f32
    %3 = vector.broadcast %cst : f32 to vector<2x128xf32>
    %c0_i32_1 = arith.constant 0 : i32
    %c128_i32 = arith.constant 128 : i32
    %4 = arith.muli %c0_i32_1, %c128_i32 : i32
    %5 = tpu.assume_multiple %4, 128 : i32
    %c0 = arith.constant 0 : index
    %6 = arith.index_cast %5 : i32 to index
    %7 = vector.load %arg2[%c0, %6] : memref<2x1024xf32, #tpu.memory_space<vmem>>, vector<2x128xf32>
    %c0_2 = arith.constant 0 : index
    %8 = arith.index_cast %5 : i32 to index
    %9 = vector.load %arg3[%c0_2, %8] : memref<1x1024xf32, #tpu.memory_space<vmem>>, vector<1x128xf32>
    %10 = vector.broadcast %9 : vector<1x128xf32> to vector<2x128xf32>
    %11 = arith.mulf %7, %10 : vector<2x128xf32>
    %12 = arith.addf %3, %11 : vector<2x128xf32>
    %c1_i32 = arith.constant 1 : i32
    %c128_i32_3 = arith.constant 128 : i32
    %13 = arith.muli %c1_i32, %c128_i32_3 : i32
    %14 = tpu.assume_multiple %13, 128 : i32
    %c0_4 = arith.constant 0 : index
    %15 = arith.index_cast %14 : i32 to index
    %16 = vector.load %arg2[%c0_4, %15] : memref<2x1024xf32, #tpu.memory_space<vmem>>, vector<2x128xf32>
    %c0_5 = arith.constant 0 : index
    %17 = arith.index_cast %14 : i32 to index
    %18 = vector.load %arg3[%c0_5, %17] : memref<1x1024xf32, #tpu.memory_space<vmem>>, vector<1x128xf32>
    %19 = vector.broadcast %18 : vector<1x128xf32> to vector<2x128xf32>
    %20 = arith.mulf %16, %19 : vector<2x128xf32>
    %21 = arith.addf %12, %20 : vector<2x128xf32>
    %c2_i32 = arith.constant 2 : i32
    %c128_i32_6 = arith.constant 128 : i32
    %22 = arith.muli %c2_i32, %c128_i32_6 : i32
    %23 = tpu.assume_multiple %22, 128 : i32
    %c0_7 = arith.constant 0 : index
    %24 = arith.index_cast %23 : i32 to index
    %25 = vector.load %arg2[%c0_7, %24] : memref<2x1024xf32, #tpu.memory_space<vmem>>, vector<2x128xf32>
    %c0_8 = arith.constant 0 : index
    %26 = arith.index_cast %23 : i32 to index
    %27 = vector.load %arg3[%c0_8, %26] : memref<1x1024xf32, #tpu.memory_space<vmem>>, vector<1x128xf32>
    %28 = vector.broadcast %27 : vector<1x128xf32> to vector<2x128xf32>
    %29 = arith.mulf %25, %28 : vector<2x128xf32>
    %30 = arith.addf %21, %29 : vector<2x128xf32>
    %c3_i32 = arith.constant 3 : i32
    %c128_i32_9 = arith.constant 128 : i32
    %31 = arith.muli %c3_i32, %c128_i32_9 : i32
    %32 = tpu.assume_multiple %31, 128 : i32
    %c0_10 = arith.constant 0 : index
    %33 = arith.index_cast %32 : i32 to index
    %34 = vector.load %arg2[%c0_10, %33] : memref<2x1024xf32, #tpu.memory_space<vmem>>, vector<2x128xf32>
    %c0_11 = arith.constant 0 : index
    %35 = arith.index_cast %32 : i32 to index
    %36 = vector.load %arg3[%c0_11, %35] : memref<1x1024xf32, #tpu.memory_space<vmem>>, vector<1x128xf32>
    %37 = vector.broadcast %36 : vector<1x128xf32> to vector<2x128xf32>
    %38 = arith.mulf %34, %37 : vector<2x128xf32>
    %39 = arith.addf %30, %38 : vector<2x128xf32>
    %c4_i32 = arith.constant 4 : i32
    %c128_i32_12 = arith.constant 128 : i32
    %40 = arith.muli %c4_i32, %c128_i32_12 : i32
    %41 = tpu.assume_multiple %40, 128 : i32
    %c0_13 = arith.constant 0 : index
    %42 = arith.index_cast %41 : i32 to index
    %43 = vector.load %arg2[%c0_13, %42] : memref<2x1024xf32, #tpu.memory_space<vmem>>, vector<2x128xf32>
    %c0_14 = arith.constant 0 : index
    %44 = arith.index_cast %41 : i32 to index
    %45 = vector.load %arg3[%c0_14, %44] : memref<1x1024xf32, #tpu.memory_space<vmem>>, vector<1x128xf32>
    %46 = vector.broadcast %45 : vector<1x128xf32> to vector<2x128xf32>
    %47 = arith.mulf %43, %46 : vector<2x128xf32>
    %48 = arith.addf %39, %47 : vector<2x128xf32>
    %c5_i32 = arith.constant 5 : i32
    %c128_i32_15 = arith.constant 128 : i32
    %49 = arith.muli %c5_i32, %c128_i32_15 : i32
    %50 = tpu.assume_multiple %49, 128 : i32
    %c0_16 = arith.constant 0 : index
    %51 = arith.index_cast %50 : i32 to index
    %52 = vector.load %arg2[%c0_16, %51] : memref<2x1024xf32, #tpu.memory_space<vmem>>, vector<2x128xf32>
    %c0_17 = arith.constant 0 : index
    %53 = arith.index_cast %50 : i32 to index
    %54 = vector.load %arg3[%c0_17, %53] : memref<1x1024xf32, #tpu.memory_space<vmem>>, vector<1x128xf32>
    %55 = vector.broadcast %54 : vector<1x128xf32> to vector<2x128xf32>
    %56 = arith.mulf %52, %55 : vector<2x128xf32>
    %57 = arith.addf %48, %56 : vector<2x128xf32>
    %c6_i32 = arith.constant 6 : i32
    %c128_i32_18 = arith.constant 128 : i32
    %58 = arith.muli %c6_i32, %c128_i32_18 : i32
    %59 = tpu.assume_multiple %58, 128 : i32
    %c0_19 = arith.constant 0 : index
    %60 = arith.index_cast %59 : i32 to index
    %61 = vector.load %arg2[%c0_19, %60] : memref<2x1024xf32, #tpu.memory_space<vmem>>, vector<2x128xf32>
    %c0_20 = arith.constant 0 : index
    %62 = arith.index_cast %59 : i32 to index
    %63 = vector.load %arg3[%c0_20, %62] : memref<1x1024xf32, #tpu.memory_space<vmem>>, vector<1x128xf32>
    %64 = vector.broadcast %63 : vector<1x128xf32> to vector<2x128xf32>
    %65 = arith.mulf %61, %64 : vector<2x128xf32>
    %66 = arith.addf %57, %65 : vector<2x128xf32>
    %c7_i32 = arith.constant 7 : i32
    %c128_i32_21 = arith.constant 128 : i32
    %67 = arith.muli %c7_i32, %c128_i32_21 : i32
    %68 = tpu.assume_multiple %67, 128 : i32
    %c0_22 = arith.constant 0 : index
    %69 = arith.index_cast %68 : i32 to index
    %70 = vector.load %arg2[%c0_22, %69] : memref<2x1024xf32, #tpu.memory_space<vmem>>, vector<2x128xf32>
    %c0_23 = arith.constant 0 : index
    %71 = arith.index_cast %68 : i32 to index
    %72 = vector.load %arg3[%c0_23, %71] : memref<1x1024xf32, #tpu.memory_space<vmem>>, vector<1x128xf32>
    %73 = vector.broadcast %72 : vector<1x128xf32> to vector<2x128xf32>
    %74 = arith.mulf %70, %73 : vector<2x128xf32>
    %75 = arith.addf %66, %74 : vector<2x128xf32>
    %c8_i32 = arith.constant 8 : i32
    %c0_24 = arith.constant 0 : index
    %c0_25 = arith.constant 0 : index
    %76 = vector.load %arg6[%c0_24, %c0_25] : memref<2x128xf32, #tpu.memory_space<vmem>>, vector<2x128xf32>
    %77 = arith.addf %76, %75 : vector<2x128xf32>
    %c0_26 = arith.constant 0 : index
    %c0_27 = arith.constant 0 : index
    %78 = vector.load %arg6[%c0_26, %c0_27] : memref<2x128xf32, #tpu.memory_space<vmem>>, vector<2x128xf32>
    tpu.vector_store %arg6[%c0_26, %c0_27], %77 {strides = array<i32>} : memref<2x128xf32, #tpu.memory_space<vmem>>, vector<2x128xf32>,
    %c0_i32_28 = arith.constant 0 : i32
    %79 = arith.cmpi eq, %arg1, %c0_i32_28 : i32
    %80 = arith.extui %79 : i1 to i32
    %c0_i32_29 = arith.constant 0 : i32
    %81 = arith.cmpi ne, %80, %c0_i32_29 : i32
    scf.if %81 {
      %c0_30 = arith.constant 0 : index
      %c0_31 = arith.constant 0 : index
      %82 = vector.load %arg6[%c0_30, %c0_31] : memref<2x128xf32, #tpu.memory_space<vmem>>, vector<2x128xf32>
      %cst_32 = arith.constant dense<0.000000e+00> : vector<2xf32>
      %83 = vector.multi_reduction <add>, %82, %cst_32 [1] : vector<2x128xf32> to vector<2xf32>
      %84 = vector.shape_cast %83 : vector<2xf32> to vector<2x1xf32>
      %c0_33 = arith.constant 0 : index
      %c0_34 = arith.constant 0 : index
      %85 = vector.load %arg4[%c0_33, %c0_34] : memref<1x1xf32, #tpu.memory_space<vmem>>, vector<1x1xf32>
      %86 = vector.broadcast %85 : vector<1x1xf32> to vector<2x1xf32>
      %87 = arith.addf %84, %86 : vector<2x1xf32>
      %cst_35 = arith.constant 0.000000e+00 : f32
      %88 = vector.broadcast %cst_35 : f32 to vector<2x1xf32>
      %89 = arith.subf %88, %87 : vector<2x1xf32>
      %90 = math.exp %89 : vector<2x1xf32>
      %cst_36 = arith.constant 1.000000e+00 : f32
      %91 = vector.broadcast %cst_36 : f32 to vector<2x1xf32>
      %92 = arith.addf %91, %90 : vector<2x1xf32>
      %cst_37 = arith.constant 1.000000e+00 : f32
      %93 = vector.broadcast %cst_37 : f32 to vector<2x1xf32>
      %94 = arith.divf %93, %92 : vector<2x1xf32>
      %c0_38 = arith.constant 0 : index
      %c0_39 = arith.constant 0 : index
      %95 = vector.load %arg5[%c0_38, %c0_39] : memref<2x1xf32, #tpu.memory_space<vmem>>, vector<2x1xf32>
      tpu.vector_store %arg5[%c0_38, %c0_39], %94 {strides = array<i32>} : memref<2x1xf32, #tpu.memory_space<vmem>>, vector<2x1xf32>,
    } else {
    }
    return
  }
  func.func @transform_0(%arg0: i32, %arg1: i32) -> (i32, i32) {
    %c0_i32 = arith.constant 0 : i32
    return %arg0, %arg1 : i32, i32
  }
  func.func @transform_1(%arg0: i32, %arg1: i32) -> (i32, i32) {
    %c0_i32 = arith.constant 0 : i32
    %c0_i32_0 = arith.constant 0 : i32
    return %c0_i32, %arg1 : i32, i32
  }
  func.func @transform_2(%arg0: i32, %arg1: i32) -> (i32, i32) {
    %c0_i32 = arith.constant 0 : i32
    %c0_i32_0 = arith.constant 0 : i32
    %c0_i32_1 = arith.constant 0 : i32
    return %c0_i32, %c0_i32_0 : i32, i32
  }
  func.func @transform_3(%arg0: i32, %arg1: i32) -> (i32, i32) {
    %c0_i32 = arith.constant 0 : i32
    %c0_i32_0 = arith.constant 0 : i32
    return %arg0, %c0_i32 : i32, i32
  }
}

</mosaic_0001>

<llo_original>
// kernel: classifier_forward.1
$region0: #{classifier_forward.1}
  #allocation0 [shape = 'u32[]', space=smem, size = 0x4, offset = 0x4, fixed_abs, tag = 'smem constant byte address 0x4 - core index']
  #allocation1 [shape = 'u32[144,128]{1,0:T(1,128)}', space=vmem, size = 0x12000, scoped, tag = 'internal scratch']
  #allocation2 [shape = 'f32[2,128]{1,0:T(2,128)}', space=vmem, size = 0x400, scoped, tag = 'scratch operand']
  #allocation3 [shape = 'f32[1,1]{1,0:T(1,128)S(1)}', space=vmem, size = 0x200, scoped, tag = 'scoped memory for classifier_forward.1']
  %s0 = inlined_call_operand.vmem [shape: f32[2,1024], index: 0, kind: input, shape index: {}]
  %s1 = inlined_call_operand.vmem [shape: f32[1,1024], index: 1, kind: input, shape index: {}]
  %s2 = inlined_call_operand.<no memory space> [shape: f32[1,1], index: 2, kind: input, shape index: {}]
  %s3 = inlined_call_operand.vmem [shape: f32[2,1], index: 3, kind: output, shape index: {}]
  %s4 = sld [smem:[#allocation0]]
  $region30: #{classifier_forward.1} parent=0
    _
  %s6 = ssub.s32 1, %s4
  %s7 = scalar_select 0, %s6, %s4
  %v8 = vstv %s2
  %9 = vst [vmem:[#allocation3] sm:$0x1] %v8
  // Predicated region
  $region2: #{classifier_forward.1} parent=0 // pred_check
    _
  $region3: #{classifier_forward.1} parent=0 // pred_check_branch
    %11 = sbr.rel (0) target = $region5
  $region4: #{classifier_forward.1} parent=0 // pred_region
    _
  $region5: #{classifier_forward.1} parent=0 // pred_fallthru
    _
  // Predicated region
  $region6: #{classifier_forward.1} parent=0 // pred_check
    _
  $region7: #{classifier_forward.1} parent=0 // pred_check_branch
    %13 = sbr.rel (0) target = $region9
  $region8: #{classifier_forward.1} parent=0 // pred_region
    _
  $region9: #{classifier_forward.1} parent=0 // pred_fallthru
    _
  // Predicated region
  $region10: #{classifier_forward.1} parent=0 // pred_check
    _
  $region11: #{classifier_forward.1} parent=0 // pred_check_branch
    %15 = sbr.rel (0) target = $region13
  $region12: #{classifier_forward.1} parent=0 // pred_region
    _
  $region13: #{classifier_forward.1} parent=0 // pred_fallthru
    _
  %p16 = scmp.eq.s32.totalorder 0, 0
  // Predicated region
  $region14: #{classifier_forward.1} parent=0 // pred_check
    %p17 = pneg %p16
  $region15: #{classifier_forward.1} parent=0 // pred_check_branch
    %19 = sbr.rel (%p17) target = $region17
  $region16: #{classifier_forward.1} parent=0 // pred_region
    %20 = vst [vmem:[#allocation2] sm:$0x3] 0.0
  $region17: #{classifier_forward.1} parent=0 // pred_fallthru
    _
  %v21 = vld [vmem:[%s0] sm:$0x3]
  %v22 = vld [vmem:[%s1] sm:$0x1]
  %v24 = vlaneseq
  %v25 = vshrl.u32 %v24, 7
  %v26 = vsub.s32 0, %v25
  %v27 = vrot.slane %v22, %v26
  %v29 = vmul.f32 %v21, %v27
  %v30 = vadd.f32 %v29, 0.0
  %s31 = scalar_lea.vmem %s0, 2
  %v32 = vld [vmem:[%s31] sm:$0x3]
  %s33 = scalar_lea.vmem %s1, 1
  %v34 = vld [vmem:[%s33] sm:$0x1]
  %v36 = vlaneseq
  %v37 = vshrl.u32 %v36, 7
  %v38 = vsub.s32 0, %v37
  %v39 = vrot.slane %v34, %v38
  %v41 = vmul.f32 %v32, %v39
  %v42 = vadd.f32 %v30, %v41
  %s43 = scalar_lea.vmem %s0, 4
  %v44 = vld [vmem:[%s43] sm:$0x3]
  %s45 = scalar_lea.vmem %s1, 2
  %v46 = vld [vmem:[%s45] sm:$0x1]
  %v48 = vlaneseq
  %v49 = vshrl.u32 %v48, 7
  %v50 = vsub.s32 0, %v49
  %v51 = vrot.slane %v46, %v50
  %v53 = vmul.f32 %v44, %v51
  %v54 = vadd.f32 %v42, %v53
  %s55 = scalar_lea.vmem %s0, 6
  %v56 = vld [vmem:[%s55] sm:$0x3]
  %s57 = scalar_lea.vmem %s1, 3
  %v58 = vld [vmem:[%s57] sm:$0x1]
  %v60 = vlaneseq
  %v61 = vshrl.u32 %v60, 7
  %v62 = vsub.s32 0, %v61
  %v63 = vrot.slane %v58, %v62
  %v65 = vmul.f32 %v56, %v63
  %v66 = vadd.f32 %v54, %v65
  %s67 = scalar_lea.vmem %s0, 8
  %v68 = vld [vmem:[%s67] sm:$0x3]
  %s69 = scalar_lea.vmem %s1, 4
  %v70 = vld [vmem:[%s69] sm:$0x1]
  %v72 = vlaneseq
  %v73 = vshrl.u32 %v72, 7
  %v74 = vsub.s32 0, %v73
  %v75 = vrot.slane %v70, %v74
  %v77 = vmul.f32 %v68, %v75
  %v78 = vadd.f32 %v66, %v77
  %s79 = scalar_lea.vmem %s0, 10
  %v80 = vld [vmem:[%s79] sm:$0x3]
  %s81 = scalar_lea.vmem %s1, 5
  %v82 = vld [vmem:[%s81] sm:$0x1]
  %v84 = vlaneseq
  %v85 = vshrl.u32 %v84, 7
  %v86 = vsub.s32 0, %v85
  %v87 = vrot.slane %v82, %v86
  %v89 = vmul.f32 %v80, %v87
  %v90 = vadd.f32 %v78, %v89
  %s91 = scalar_lea.vmem %s0, 12
  %v92 = vld [vmem:[%s91] sm:$0x3]
  %s93 = scalar_lea.vmem %s1, 6
  %v94 = vld [vmem:[%s93] sm:$0x1]
  %v96 = vlaneseq
  %v97 = vshrl.u32 %v96, 7
  %v98 = vsub.s32 0, %v97
  %v99 = vrot.slane %v94, %v98
  %v101 = vmul.f32 %v92, %v99
  %v102 = vadd.f32 %v90, %v101
  %s103 = scalar_lea.vmem %s0, 14
  %v104 = vld [vmem:[%s103] sm:$0x3]
  %s105 = scalar_lea.vmem %s1, 7
  %v106 = vld [vmem:[%s105] sm:$0x1]
  %v108 = vlaneseq
  %v109 = vshrl.u32 %v108, 7
  %v110 = vsub.s32 0, %v109
  %v111 = vrot.slane %v106, %v110
  %v113 = vmul.f32 %v104, %v111
  %v114 = vadd.f32 %v102, %v113
  %v115 = vld [vmem:[#allocation2] sm:$0x3]
  %v116 = vadd.f32 %v115, %v114
  %117 = vst [vmem:[#allocation2] sm:$0x3] %v116
  // Predicated region
  $region18: #{classifier_forward.1} parent=0 // pred_check
    %p118 = pneg %p16
  $region19: #{classifier_forward.1} parent=0 // pred_check_branch
    %120 = sbr.rel (%p118) target = $region21
  $region20: #{classifier_forward.1} parent=0 // pred_region
    %v121 = vld [vmem:[#allocation2] sm:$0x3]
    %vm122 = vcmask 1041408
    %v123 = vsel %vm122, %v121, 0.0
    %124 = vadd.xlane.f32.xlu0 %v123
    %v125 = vpop.xlane.xlu0 %124
    %v126 = vld [vmem:[#allocation3] sm:$0x1]
    %v128 = vlaneseq
    %v129 = vshrl.u32 %v128, 7
    %v130 = vsub.s32 0, %v129
    %v131 = vrot.slane %v126, %v130
    %v133 = vadd.f32 %v125, %v131
    %v134 = vsub.f32 0.0, %v133
    %v135 = vmul.f32 %v134, 1.442695
    %v136 = vpow.pop %v135
    %v137 = vadd.f32 %v136, 1.0
    %v138 = vrcp.pop %v137
    %v139 = vmul.f32 1.0, %v138
    %vm140 = vcmask 1024
    %141 = vst.msk [vmem:[%s3] sm:$0x3] %vm140, %v139
  $region21: #{classifier_forward.1} parent=0 // pred_fallthru
    _
  // Predicated region
  $region22: #{classifier_forward.1} parent=0 // pred_check
    _
  $region23: #{classifier_forward.1} parent=0 // pred_check_branch
    %143 = sbr.rel (0) target = $region25
  $region24: #{classifier_forward.1} parent=0 // pred_region
    _
  $region25: #{classifier_forward.1} parent=0 // pred_fallthru
    _
  // Predicated region
  $region26: #{classifier_forward.1} parent=0 // pred_check
    _
  $region27: #{classifier_forward.1} parent=0 // pred_check_branch
    %145 = sbr.rel (0) target = $region29
  $region28: #{classifier_forward.1} parent=0 // pred_region
    _
  $region29: #{classifier_forward.1} parent=0 // pred_fallthru
    _

</llo_original>
